<compile_context>
chip_gen: v7x
topology: tpu7x:2x2x1
jax: 0.10.0
libtpu: 0.0.40
codegen_flags: <defaults>
</compile_context>

<pallas_src>
import jax
import jax.numpy as jnp
from jax.experimental import pallas as pl
from jax.experimental.pallas import tpu as pltpu


def _round_up(x, m):
    return ((x + m - 1) // m) * m


def _build_padded_image(x_ref, xpad_ref, *, h, w, pad, w_pad):
    """Assemble the zero-padded, row-major flattened image in VMEM.

    x_ref:    (1, Cin_p, h*w)  raw flattened image (bf16)
    xpad_ref: (Cin_p, s_tot)   scratch: memset to 0, real rows copied at
                               stride w_pad (row r -> lanes [(r+pad)*w_pad+pad, +w))
    """
    xpad_ref[...] = jnp.zeros_like(xpad_ref)
    # TODO(synk): switch to pl.loop + pl.ds for very tall images (static unroll
    # is fine for typical GAN feature-map heights).
    for r in range(h):
        dst = (r + pad) * w_pad + pad
        xpad_ref[:, dst:dst + w] = x_ref[0, :, r * w:(r + 1) * w]


def _make_fused_kernel(*, cin_p, h, w, k, pad, w_pad, s_al, c_axis):
    """Small-Cin path: cached im2col + one deep MXU matmul per (image, cout tile)."""
    taps = [(dy, dx) for dy in range(k) for dx in range(k)]

    def kernel(x_ref, w_ref, b_ref, o_ref, xpad_ref, patch_ref):
        # x_ref:     (1, Cin_p, h*w)       bf16  (padded in-kernel)
        # w_ref:     (Cout_t, K*K*Cin_p)   bf16  (equalized-LR scale folded in)
        # b_ref:     (Cout_t, 1)           f32
        # o_ref:     (1, Cout_t, S_al)     f32   lane-dense flattened output
        # xpad_ref:  (Cin_p, s_tot)        bf16  scratch (padded flat image)
        # patch_ref: (K*K*Cin_p, S_al)     bf16  scratch (im2col patches)

        # Build padded image + im2col patches only when the image changes
        # (innermost grid axis is the cout tile, kept sequential/"arbitrary").
        @pl.when(pl.program_id(c_axis) == 0)
        def _():
            _build_padded_image(x_ref, xpad_ref, h=h, w=w, pad=pad, w_pad=w_pad)
            for t, (dy, dx) in enumerate(taps):
                start = dy * w_pad + dx          # static lane slice per tap
                patch_ref[t * cin_p:(t + 1) * cin_p, :] = (
                    xpad_ref[:, start:start + s_al])

        # single fused MXU matmul, contraction depth K*K*Cin_p, f32 accumulate
        acc = jnp.dot(w_ref[...], patch_ref[...],
                      preferred_element_type=jnp.float32)     # (Cout_t, S_al)
        o_ref[0] = (acc + b_ref[...]).astype(o_ref.dtype)

    return kernel


def _make_tap_kernel(*, cin_p, h, w, k, pad, w_pad, s_al, c_axis, cache_x):
    """Large-Cin path: k*k tap accumulation (no 9x im2col materialization)."""
    taps = [(dy, dx) for dy in range(k) for dx in range(k)]

    def kernel(x_ref, w_ref, b_ref, o_ref, xpad_ref, acc_ref):
        # x_ref:    (1, Cin_p, h*w)        bf16
        # w_ref:    (K*K, Cout_t, Cin_p)   bf16  (scale folded in)
        # b_ref:    (Cout_t, 1)            f32
        # o_ref:    (1, Cout_t, S_al)      f32
        # xpad_ref: (Cin_p, s_tot)         bf16  scratch (padded flat image)
        # acc_ref:  (Cout_t, S_al)         f32   scratch accumulator
        def assemble():
            _build_padded_image(x_ref, xpad_ref, h=h, w=w, pad=pad, w_pad=w_pad)

        if cache_x:
            # image-outer grid: rebuild only when the image changes
            pl.when(pl.program_id(c_axis) == 0)(assemble)
        else:
            # cout-outer grid (weights resident): image changes every step
            assemble()

        for t, (dy, dx) in enumerate(taps):
            start = dy * w_pad + dx
            d = jnp.dot(w_ref[t], xpad_ref[:, start:start + s_al],
                        preferred_element_type=jnp.float32)   # (Cout_t, S_al)
            if t == 0:
                acc_ref[...] = d
            else:
                acc_ref[...] += d
        o_ref[0] = (acc_ref[...] + b_ref[...]).astype(o_ref.dtype)

    return kernel


def weighted_scaled_conv(x_nchw, weight_oikk, bias, *, stride=1, padding=1):
    """x_nchw: (N, Cin, H, W); weight: (Cout, Cin, K, K); bias: (Cout,). Returns f32 NCHW."""
    assert stride == 1, "kernel written for stride=1 (module default)"
    n, cin, h, w = x_nchw.shape
    cout, cin_w, kh, kw = weight_oikk.shape
    assert cin == cin_w and kh == kw
    k = kh
    pad = padding
    assert pad >= 0
    scale = (2.0 / (cin * k ** 2)) ** 0.5

    # ---- geometry of the flattened zero-padded frame ----
    h_pad, w_pad = h + 2 * pad, w + 2 * pad
    h_out, w_out = h_pad - k + 1, w_pad - k + 1
    assert h_out >= 1 and w_out >= 1
    s_img = h_pad * w_pad
    s_use = h_out * w_pad                      # emitted lanes (border rows skipped)
    s_al = _round_up(s_use, 128)               # 128-aligned output lane axis
    # trailing zero guard so every tap slice (start = dy*w_pad + dx) is in-bounds
    s_tot = _round_up(max(s_img, (k - 1) * (w_pad + 1) + s_al), 128)

    # channels rounded to the 8-sublane tile (no-op for realistic GAN widths)
    cin_p = _round_up(cin, 8)
    kkc = k * k * cin_p

    # ---- operand prep: bf16 operands, f32 accumulate in-kernel ----
    x_in = x_nchw
    if cin_p != cin:
        x_in = jnp.pad(x_in, ((0, 0), (0, cin_p - cin), (0, 0), (0, 0)))
    # free reshape (contiguous dims) + single bf16 cast; NO padded-activation round trip
    x_flat = x_in.reshape(n, cin_p, h * w).astype(jnp.bfloat16)

    # fold the equalized-LR scale into the weights: conv(x*s, W) == conv(x, s*W)
    w_scaled = weight_oikk.astype(jnp.float32) * scale
    if cin_p != cin:
        w_scaled = jnp.pad(w_scaled, ((0, 0), (0, cin_p - cin), (0, 0), (0, 0)))
    b2 = bias.astype(jnp.float32).reshape(cout, 1)

    # ---- Cout tiling: 128-multiples (exact v5e MXU tile; >=2 steps for megacore) ----
    if cout % 128 == 0:
        cout_t = 256 if (cout % 256 == 0 and cout > 256 and n > 1) else 128
    else:
        cout_t = cout
    n_ct = cout // cout_t

    fused = cin_p < 128      # deep fused contraction only where it raises MXU util

    if fused:
        # (Cout, Cin_p, K, K) -> (Cout, K, K, Cin_p) -> (Cout, K*K*Cin_p)
        w_arr = jnp.transpose(w_scaled, (0, 2, 3, 1)).reshape(cout, kkc)
        w_arr = w_arr.astype(jnp.bfloat16)
    else:
        # (Cout, Cin_p, K, K) -> (K, K, Cout, Cin_p) -> (K*K, Cout, Cin_p)
        w_arr = jnp.transpose(w_scaled, (2, 3, 0, 1)).reshape(k * k, cout, cin_p)
        w_arr = w_arr.astype(jnp.bfloat16)

    # ---- grid order: keep whichever operand causes more re-fetch traffic resident ----
    x_bytes = n * cin_p * h * w * 2
    w_bytes = int(w_arr.size) * 2
    # order A (image outer):  x streamed once, weights re-read once per image
    # order B (cout  outer):  weights streamed once, x re-read once per cout tile
    order_a = fused or ((n - 1) * w_bytes <= (n_ct - 1) * x_bytes)
    cache_x = order_a     # padded image / patches rebuilt only when the image changes

    if order_a:
        grid = (n, n_ct)
        c_axis = 1
        x_map = lambda b, c: (b, 0, 0)
        b_map = lambda b, c: (c, 0)
        o_map = lambda b, c: (b, c, 0)
        w_map = (lambda b, c: (c, 0)) if fused else (lambda b, c: (0, c, 0))
        # the inner cout axis must stay sequential: the cached im2col / padded
        # image is only valid after program_id(c_axis)==0 ran for this image.
        dims = ("parallel", "arbitrary")
    else:
        grid = (n_ct, n)
        c_axis = 0
        x_map = lambda c, b: (b, 0, 0)
        b_map = lambda c, b: (c, 0)
        o_map = lambda c, b: (b, c, 0)
        w_map = lambda c, b: (0, c, 0)
        dims = ("parallel", "parallel")

    if fused:
        kernel = _make_fused_kernel(cin_p=cin_p, h=h, w=w, k=k, pad=pad,
                                    w_pad=w_pad, s_al=s_al, c_axis=c_axis)
        w_spec = pl.BlockSpec((cout_t, kkc), w_map)
        scratch = [pltpu.VMEM((cin_p, s_tot), jnp.bfloat16),
                   pltpu.VMEM((kkc, s_al), jnp.bfloat16)]
        w_blk_bytes = cout_t * kkc * 2
        scratch_bytes = cin_p * s_tot * 2 + kkc * s_al * 2
    else:
        kernel = _make_tap_kernel(cin_p=cin_p, h=h, w=w, k=k, pad=pad,
                                  w_pad=w_pad, s_al=s_al, c_axis=c_axis,
                                  cache_x=cache_x)
        w_spec = pl.BlockSpec((k * k, cout_t, cin_p), w_map)
        scratch = [pltpu.VMEM((cin_p, s_tot), jnp.bfloat16),
                   pltpu.VMEM((cout_t, s_al), jnp.float32)]
        w_blk_bytes = k * k * cout_t * cin_p * 2
        scratch_bytes = cin_p * s_tot * 2 + cout_t * s_al * 4

    # ---- generation-aware VMEM budget derived from the actual block sizes ----
    blk_bytes = (2 * (cin_p * h * w * 2          # x block (double-buffered)
                      + w_blk_bytes              # weight block
                      + cout_t * 4               # bias block
                      + cout_t * s_al * 4)       # output block
                 + scratch_bytes)
    try:
        cap = int(getattr(pltpu.get_tpu_info(), "vmem_capacity_bytes",
                          64 * 1024 * 1024))
    except Exception:                            # CPU tracing / older runtime
        cap = 64 * 1024 * 1024
    vmem_limit = int(min(cap * 3 // 4, max(blk_bytes + (4 << 20), 32 << 20)))
    # NOTE: if the weight DMA per inner step is ever exposed on v6e (bf16 compute
    # is fast), raise the weight spec to pipeline_mode=pl.Buffered(3).

    flops = 2 * n * cout * kkc * s_al
    bytes_accessed = (x_bytes * (1 if order_a else n_ct)
                      + w_bytes * (n if order_a else 1)
                      + cout * 4 + n * cout * s_al * 4)

    out_flat = pl.pallas_call(
        kernel,
        out_shape=jax.ShapeDtypeStruct((n, cout, s_al), jnp.float32),
        grid_spec=pltpu.PrefetchScalarGridSpec(
            num_scalar_prefetch=0,
            grid=grid,
            in_specs=[
                pl.BlockSpec((1, cin_p, h * w), x_map),
                w_spec,
                pl.BlockSpec((cout_t, 1), b_map),
            ],
            out_specs=pl.BlockSpec((1, cout_t, s_al), o_map),
            scratch_shapes=scratch,
        ),
        compiler_params=pltpu.CompilerParams(
            dimension_semantics=dims,
            vmem_limit_bytes=vmem_limit,
        ),
        cost_estimate=pl.CostEstimate(
            flops=int(flops), transcendentals=0,
            bytes_accessed=int(bytes_accessed)),
    )(x_flat, w_arr, b2)

    # lane-dense kernel output -> NCHW: drop alignment tail, free reshape, column trim
    out = out_flat[:, :, :s_use].reshape(n, cout, h_out, w_pad)
    return out[:, :, :, :w_out]


def _reference(x_nchw, weight, bias, *, stride=1, padding=1):
    cin, k = weight.shape[1], weight.shape[2]
    scale = (2.0 / (cin * k ** 2)) ** 0.5
    y = jax.lax.conv_general_dilated(
        x_nchw * scale, weight,
        window_strides=(stride, stride),
        padding=[(padding, padding), (padding, padding)],
        dimension_numbers=("NCHW", "OIHW", "NCHW"))
    return y + bias.reshape(1, -1, 1, 1)


if __name__ == "__main__":
    key = jax.random.PRNGKey(0)
    k_x1, k_w1, k_x2, k_w2, k_b2 = jax.random.split(key, 5)

    # --- case 1: module-default small shapes (small Cin -> fused im2col path) ---
    N, C_IN, C_OUT, H, W, K = 2, 4, 8, 16, 16, 3
    x1 = jax.random.normal(k_x1, (N, C_IN, H, W), dtype=jnp.float32)
    w1 = jax.random.normal(k_w1, (C_OUT, C_IN, K, K), dtype=jnp.float32)  # normal_ init
    b1 = jnp.zeros((C_OUT,), dtype=jnp.float32)                           # zeros_ init

    out1 = jax.block_until_ready(
        weighted_scaled_conv(x1, w1, b1, stride=1, padding=1))
    ref1 = _reference(x1, w1, b1, stride=1, padding=1)
    assert out1.shape == (N, C_OUT, H, W)
    # bf16 operands / f32 accumulate -> looser tolerance vs the f32 reference
    assert jnp.allclose(out1, ref1, atol=5e-2, rtol=5e-2), \
        "mismatch vs reference conv (fused path)"

    # --- case 2: wide channels (Cin >= 128 -> per-tap MXU accumulation path) ---
    N2, C2_IN, C2_OUT, H2, W2 = 2, 128, 128, 8, 8
    x2 = jax.random.normal(k_x2, (N2, C2_IN, H2, W2), dtype=jnp.float32)
    w2 = jax.random.normal(k_w2, (C2_OUT, C2_IN, K, K), dtype=jnp.float32)
    b2 = 0.1 * jax.random.normal(k_b2, (C2_OUT,), dtype=jnp.float32)  # exercise bias add

    out2 = jax.block_until_ready(
        weighted_scaled_conv(x2, w2, b2, stride=1, padding=1))
    ref2 = _reference(x2, w2, b2, stride=1, padding=1)
    assert out2.shape == (N2, C2_OUT, H2, W2)
    assert jnp.allclose(out2, ref2, atol=5e-2, rtol=5e-2), \
        "mismatch vs reference conv (tap path)"

    print("KERNEL_OK")
</pallas_src>

<mosaic_0001>
module attributes {stable_mosaic.version = 11 : i64} {
  func.func @kernel(%arg0: i32, %arg1: i32, %arg2: memref<1x8x256xbf16, #tpu.memory_space<vmem>>, %arg3: memref<8x72xbf16, #tpu.memory_space<vmem>>, %arg4: memref<8x1xf32, #tpu.memory_space<vmem>>, %arg5: memref<1x8x384xf32, #tpu.memory_space<vmem>>, %arg6: memref<8x512xbf16, #tpu.memory_space<vmem>>, %arg7: memref<72x384xbf16, #tpu.memory_space<vmem>>) attributes {dimension_semantics = [#tpu.dimension_semantics<parallel>, #tpu.dimension_semantics<arbitrary>], iteration_bounds = array<i64: 2, 1>, scalar_prefetch = 0 : i64, scratch_operands = 2 : i64, tpu.core_type = #tpu.core_type<tc>, window_params = [{transform_indices = @transform_0, window_bounds = array<i64: 1, 8, 256>}, {transform_indices = @transform_1, window_bounds = array<i64: 8, 72>}, {transform_indices = @transform_2, window_bounds = array<i64: 8, 1>}, {transform_indices = @transform_3, window_bounds = array<i64: 1, 8, 384>}]} {
    %c0_i32 = arith.constant 0 : i32
    %0 = arith.cmpi eq, %arg1, %c0_i32 : i32
    %1 = arith.extui %0 : i1 to i32
    %c0_i32_0 = arith.constant 0 : i32
    %2 = arith.cmpi ne, %1, %c0_i32_0 : i32
    scf.if %2 {
      %cst_9 = arith.constant 0.000000e+00 : bf16
      %12 = vector.broadcast %cst_9 : bf16 to vector<8x512xbf16>
      %c0_10 = arith.constant 0 : index
      %c0_11 = arith.constant 0 : index
      %13 = vector.load %arg6[%c0_10, %c0_11] : memref<8x512xbf16, #tpu.memory_space<vmem>>, vector<8x512xbf16>
      tpu.vector_store %arg6[%c0_10, %c0_11], %12 {strides = array<i32>} : memref<8x512xbf16, #tpu.memory_space<vmem>>, vector<8x512xbf16>,
      %c0_12 = arith.constant 0 : index
      %c0_13 = arith.constant 0 : index
      %c0_14 = arith.constant 0 : index
      %14 = vector.load %arg2[%c0_12, %c0_13, %c0_14] : memref<1x8x256xbf16, #tpu.memory_space<vmem>>, vector<1x8x16xbf16>
      %15 = vector.shape_cast %14 : vector<1x8x16xbf16> to vector<8x16xbf16>
      %c0_15 = arith.constant 0 : index
      %c19 = arith.constant 19 : index
      %16 = vector.load %arg6[%c0_15, %c19] : memref<8x512xbf16, #tpu.memory_space<vmem>>, vector<8x16xbf16>
      tpu.vector_store %arg6[%c0_15, %c19], %15 {strides = array<i32>} : memref<8x512xbf16, #tpu.memory_space<vmem>>, vector<8x16xbf16>,
      %c0_16 = arith.constant 0 : index
      %c0_17 = arith.constant 0 : index
      %c16 = arith.constant 16 : index
      %17 = vector.load %arg2[%c0_16, %c0_17, %c16] : memref<1x8x256xbf16, #tpu.memory_space<vmem>>, vector<1x8x16xbf16>
      %18 = vector.shape_cast %17 : vector<1x8x16xbf16> to vector<8x16xbf16>
      %c0_18 = arith.constant 0 : index
      %c37 = arith.constant 37 : index
      %19 = vector.load %arg6[%c0_18, %c37] : memref<8x512xbf16, #tpu.memory_space<vmem>>, vector<8x16xbf16>
      tpu.vector_store %arg6[%c0_18, %c37], %18 {strides = array<i32>} : memref<8x512xbf16, #tpu.memory_space<vmem>>, vector<8x16xbf16>,
      %c0_19 = arith.constant 0 : index
      %c0_20 = arith.constant 0 : index
      %c32 = arith.constant 32 : index
      %20 = vector.load %arg2[%c0_19, %c0_20, %c32] : memref<1x8x256xbf16, #tpu.memory_space<vmem>>, vector<1x8x16xbf16>
      %21 = vector.shape_cast %20 : vector<1x8x16xbf16> to vector<8x16xbf16>
      %c0_21 = arith.constant 0 : index
      %c55 = arith.constant 55 : index
      %22 = vector.load %arg6[%c0_21, %c55] : memref<8x512xbf16, #tpu.memory_space<vmem>>, vector<8x16xbf16>
      tpu.vector_store %arg6[%c0_21, %c55], %21 {strides = array<i32>} : memref<8x512xbf16, #tpu.memory_space<vmem>>, vector<8x16xbf16>,
      %c0_22 = arith.constant 0 : index
      %c0_23 = arith.constant 0 : index
      %c48 = arith.constant 48 : index
      %23 = vector.load %arg2[%c0_22, %c0_23, %c48] : memref<1x8x256xbf16, #tpu.memory_space<vmem>>, vector<1x8x16xbf16>
      %24 = vector.shape_cast %23 : vector<1x8x16xbf16> to vector<8x16xbf16>
      %c0_24 = arith.constant 0 : index
      %c73 = arith.constant 73 : index
      %25 = vector.load %arg6[%c0_24, %c73] : memref<8x512xbf16, #tpu.memory_space<vmem>>, vector<8x16xbf16>
      tpu.vector_store %arg6[%c0_24, %c73], %24 {strides = array<i32>} : memref<8x512xbf16, #tpu.memory_space<vmem>>, vector<8x16xbf16>,
      %c0_25 = arith.constant 0 : index
      %c0_26 = arith.constant 0 : index
      %c64 = arith.constant 64 : index
      %26 = vector.load %arg2[%c0_25, %c0_26, %c64] : memref<1x8x256xbf16, #tpu.memory_space<vmem>>, vector<1x8x16xbf16>
      %27 = vector.shape_cast %26 : vector<1x8x16xbf16> to vector<8x16xbf16>
      %c0_27 = arith.constant 0 : index
      %c91 = arith.constant 91 : index
      %28 = vector.load %arg6[%c0_27, %c91] : memref<8x512xbf16, #tpu.memory_space<vmem>>, vector<8x16xbf16>
      tpu.vector_store %arg6[%c0_27, %c91], %27 {strides = array<i32>} : memref<8x512xbf16, #tpu.memory_space<vmem>>, vector<8x16xbf16>,
      %c0_28 = arith.constant 0 : index
      %c0_29 = arith.constant 0 : index
      %c80 = arith.constant 80 : index
      %29 = vector.load %arg2[%c0_28, %c0_29, %c80] : memref<1x8x256xbf16, #tpu.memory_space<vmem>>, vector<1x8x16xbf16>
      %30 = vector.shape_cast %29 : vector<1x8x16xbf16> to vector<8x16xbf16>
      %c0_30 = arith.constant 0 : index
      %c109 = arith.constant 109 : index
      %31 = vector.load %arg6[%c0_30, %c109] : memref<8x512xbf16, #tpu.memory_space<vmem>>, vector<8x16xbf16>
      tpu.vector_store %arg6[%c0_30, %c109], %30 {strides = array<i32>} : memref<8x512xbf16, #tpu.memory_space<vmem>>, vector<8x16xbf16>,
      %c0_31 = arith.constant 0 : index
      %c0_32 = arith.constant 0 : index
      %c96 = arith.constant 96 : index
      %32 = vector.load %arg2[%c0_31, %c0_32, %c96] : memref<1x8x256xbf16, #tpu.memory_space<vmem>>, vector<1x8x16xbf16>
      %33 = vector.shape_cast %32 : vector<1x8x16xbf16> to vector<8x16xbf16>
      %c0_33 = arith.constant 0 : index
      %c127 = arith.constant 127 : index
      %34 = vector.load %arg6[%c0_33, %c127] : memref<8x512xbf16, #tpu.memory_space<vmem>>, vector<8x16xbf16>
      tpu.vector_store %arg6[%c0_33, %c127], %33 {strides = array<i32>} : memref<8x512xbf16, #tpu.memory_space<vmem>>, vector<8x16xbf16>,
      %c0_34 = arith.constant 0 : index
      %c0_35 = arith.constant 0 : index
      %c112 = arith.constant 112 : index
      %35 = vector.load %arg2[%c0_34, %c0_35, %c112] : memref<1x8x256xbf16, #tpu.memory_space<vmem>>, vector<1x8x16xbf16>
      %36 = vector.shape_cast %35 : vector<1x8x16xbf16> to vector<8x16xbf16>
      %c0_36 = arith.constant 0 : index
      %c145 = arith.constant 145 : index
      %37 = vector.load %arg6[%c0_36, %c145] : memref<8x512xbf16, #tpu.memory_space<vmem>>, vector<8x16xbf16>
      tpu.vector_store %arg6[%c0_36, %c145], %36 {strides = array<i32>} : memref<8x512xbf16, #tpu.memory_space<vmem>>, vector<8x16xbf16>,
      %c0_37 = arith.constant 0 : index
      %c0_38 = arith.constant 0 : index
      %c128 = arith.constant 128 : index
      %38 = vector.load %arg2[%c0_37, %c0_38, %c128] : memref<1x8x256xbf16, #tpu.memory_space<vmem>>, vector<1x8x16xbf16>
      %39 = vector.shape_cast %38 : vector<1x8x16xbf16> to vector<8x16xbf16>
      %c0_39 = arith.constant 0 : index
      %c163 = arith.constant 163 : index
      %40 = vector.load %arg6[%c0_39, %c163] : memref<8x512xbf16, #tpu.memory_space<vmem>>, vector<8x16xbf16>
      tpu.vector_store %arg6[%c0_39, %c163], %39 {strides = array<i32>} : memref<8x512xbf16, #tpu.memory_space<vmem>>, vector<8x16xbf16>,
      %c0_40 = arith.constant 0 : index
      %c0_41 = arith.constant 0 : index
      %c144 = arith.constant 144 : index
      %41 = vector.load %arg2[%c0_40, %c0_41, %c144] : memref<1x8x256xbf16, #tpu.memory_space<vmem>>, vector<1x8x16xbf16>
      %42 = vector.shape_cast %41 : vector<1x8x16xbf16> to vector<8x16xbf16>
      %c0_42 = arith.constant 0 : index
      %c181 = arith.constant 181 : index
      %43 = vector.load %arg6[%c0_42, %c181] : memref<8x512xbf16, #tpu.memory_space<vmem>>, vector<8x16xbf16>
      tpu.vector_store %arg6[%c0_42, %c181], %42 {strides = array<i32>} : memref<8x512xbf16, #tpu.memory_space<vmem>>, vector<8x16xbf16>,
      %c0_43 = arith.constant 0 : index
      %c0_44 = arith.constant 0 : index
      %c160 = arith.constant 160 : index
      %44 = vector.load %arg2[%c0_43, %c0_44, %c160] : memref<1x8x256xbf16, #tpu.memory_space<vmem>>, vector<1x8x16xbf16>
      %45 = vector.shape_cast %44 : vector<1x8x16xbf16> to vector<8x16xbf16>
      %c0_45 = arith.constant 0 : index
      %c199 = arith.constant 199 : index
      %46 = vector.load %arg6[%c0_45, %c199] : memref<8x512xbf16, #tpu.memory_space<vmem>>, vector<8x16xbf16>
      tpu.vector_store %arg6[%c0_45, %c199], %45 {strides = array<i32>} : memref<8x512xbf16, #tpu.memory_space<vmem>>, vector<8x16xbf16>,
      %c0_46 = arith.constant 0 : index
      %c0_47 = arith.constant 0 : index
      %c176 = arith.constant 176 : index
      %47 = vector.load %arg2[%c0_46, %c0_47, %c176] : memref<1x8x256xbf16, #tpu.memory_space<vmem>>, vector<1x8x16xbf16>
      %48 = vector.shape_cast %47 : vector<1x8x16xbf16> to vector<8x16xbf16>
      %c0_48 = arith.constant 0 : index
      %c217 = arith.constant 217 : index
      %49 = vector.load %arg6[%c0_48, %c217] : memref<8x512xbf16, #tpu.memory_space<vmem>>, vector<8x16xbf16>
      tpu.vector_store %arg6[%c0_48, %c217], %48 {strides = array<i32>} : memref<8x512xbf16, #tpu.memory_space<vmem>>, vector<8x16xbf16>,
      %c0_49 = arith.constant 0 : index
      %c0_50 = arith.constant 0 : index
      %c192 = arith.constant 192 : index
      %50 = vector.load %arg2[%c0_49, %c0_50, %c192] : memref<1x8x256xbf16, #tpu.memory_space<vmem>>, vector<1x8x16xbf16>
      %51 = vector.shape_cast %50 : vector<1x8x16xbf16> to vector<8x16xbf16>
      %c0_51 = arith.constant 0 : index
      %c235 = arith.constant 235 : index
      %52 = vector.load %arg6[%c0_51, %c235] : memref<8x512xbf16, #tpu.memory_space<vmem>>, vector<8x16xbf16>
      tpu.vector_store %arg6[%c0_51, %c235], %51 {strides = array<i32>} : memref<8x512xbf16, #tpu.memory_space<vmem>>, vector<8x16xbf16>,
      %c0_52 = arith.constant 0 : index
      %c0_53 = arith.constant 0 : index
      %c208 = arith.constant 208 : index
      %53 = vector.load %arg2[%c0_52, %c0_53, %c208] : memref<1x8x256xbf16, #tpu.memory_space<vmem>>, vector<1x8x16xbf16>
      %54 = vector.shape_cast %53 : vector<1x8x16xbf16> to vector<8x16xbf16>
      %c0_54 = arith.constant 0 : index
      %c253 = arith.constant 253 : index
      %55 = vector.load %arg6[%c0_54, %c253] : memref<8x512xbf16, #tpu.memory_space<vmem>>, vector<8x16xbf16>
      tpu.vector_store %arg6[%c0_54, %c253], %54 {strides = array<i32>} : memref<8x512xbf16, #tpu.memory_space<vmem>>, vector<8x16xbf16>,
      %c0_55 = arith.constant 0 : index
      %c0_56 = arith.constant 0 : index
      %c224 = arith.constant 224 : index
      %56 = vector.load %arg2[%c0_55, %c0_56, %c224] : memref<1x8x256xbf16, #tpu.memory_space<vmem>>, vector<1x8x16xbf16>
      %57 = vector.shape_cast %56 : vector<1x8x16xbf16> to vector<8x16xbf16>
      %c0_57 = arith.constant 0 : index
      %c271 = arith.constant 271 : index
      %58 = vector.load %arg6[%c0_57, %c271] : memref<8x512xbf16, #tpu.memory_space<vmem>>, vector<8x16xbf16>
      tpu.vector_store %arg6[%c0_57, %c271], %57 {strides = array<i32>} : memref<8x512xbf16, #tpu.memory_space<vmem>>, vector<8x16xbf16>,
      %c0_58 = arith.constant 0 : index
      %c0_59 = arith.constant 0 : index
      %c240 = arith.constant 240 : index
      %59 = vector.load %arg2[%c0_58, %c0_59, %c240] : memref<1x8x256xbf16, #tpu.memory_space<vmem>>, vector<1x8x16xbf16>
      %60 = vector.shape_cast %59 : vector<1x8x16xbf16> to vector<8x16xbf16>
      %c0_60 = arith.constant 0 : index
      %c289 = arith.constant 289 : index
      %61 = vector.load %arg6[%c0_60, %c289] : memref<8x512xbf16, #tpu.memory_space<vmem>>, vector<8x16xbf16>
      tpu.vector_store %arg6[%c0_60, %c289], %60 {strides = array<i32>} : memref<8x512xbf16, #tpu.memory_space<vmem>>, vector<8x16xbf16>,
      %c0_61 = arith.constant 0 : index
      %c0_62 = arith.constant 0 : index
      %62 = vector.load %arg6[%c0_61, %c0_62] : memref<8x512xbf16, #tpu.memory_space<vmem>>, vector<8x384xbf16>
      %c0_63 = arith.constant 0 : index
      %c0_64 = arith.constant 0 : index
      %63 = vector.load %arg7[%c0_63, %c0_64] : memref<72x384xbf16, #tpu.memory_space<vmem>>, vector<8x384xbf16>
      tpu.vector_store %arg7[%c0_63, %c0_64], %62 {strides = array<i32>} : memref<72x384xbf16, #tpu.memory_space<vmem>>, vector<8x384xbf16>,
      %c0_65 = arith.constant 0 : index
      %c1 = arith.constant 1 : index
      %64 = vector.load %arg6[%c0_65, %c1] : memref<8x512xbf16, #tpu.memory_space<vmem>>, vector<8x384xbf16>
      %c8 = arith.constant 8 : index
      %c0_66 = arith.constant 0 : index
      %65 = vector.load %arg7[%c8, %c0_66] : memref<72x384xbf16, #tpu.memory_space<vmem>>, vector<8x384xbf16>
      tpu.vector_store %arg7[%c8, %c0_66], %64 {strides = array<i32>} : memref<72x384xbf16, #tpu.memory_space<vmem>>, vector<8x384xbf16>,
      %c0_67 = arith.constant 0 : index
      %c2 = arith.constant 2 : index
      %66 = vector.load %arg6[%c0_67, %c2] : memref<8x512xbf16, #tpu.memory_space<vmem>>, vector<8x384xbf16>
      %c16_68 = arith.constant 16 : index
      %c0_69 = arith.constant 0 : index
      %67 = vector.load %arg7[%c16_68, %c0_69] : memref<72x384xbf16, #tpu.memory_space<vmem>>, vector<8x384xbf16>
      tpu.vector_store %arg7[%c16_68, %c0_69], %66 {strides = array<i32>} : memref<72x384xbf16, #tpu.memory_space<vmem>>, vector<8x384xbf16>,
      %c0_70 = arith.constant 0 : index
      %c18 = arith.constant 18 : index
      %68 = vector.load %arg6[%c0_70, %c18] : memref<8x512xbf16, #tpu.memory_space<vmem>>, vector<8x384xbf16>
      %c24 = arith.constant 24 : index
      %c0_71 = arith.constant 0 : index
      %69 = vector.load %arg7[%c24, %c0_71] : memref<72x384xbf16, #tpu.memory_space<vmem>>, vector<8x384xbf16>
      tpu.vector_store %arg7[%c24, %c0_71], %68 {strides = array<i32>} : memref<72x384xbf16, #tpu.memory_space<vmem>>, vector<8x384xbf16>,
      %c0_72 = arith.constant 0 : index
      %c19_73 = arith.constant 19 : index
      %70 = vector.load %arg6[%c0_72, %c19_73] : memref<8x512xbf16, #tpu.memory_space<vmem>>, vector<8x384xbf16>
      %c32_74 = arith.constant 32 : index
      %c0_75 = arith.constant 0 : index
      %71 = vector.load %arg7[%c32_74, %c0_75] : memref<72x384xbf16, #tpu.memory_space<vmem>>, vector<8x384xbf16>
      tpu.vector_store %arg7[%c32_74, %c0_75], %70 {strides = array<i32>} : memref<72x384xbf16, #tpu.memory_space<vmem>>, vector<8x384xbf16>,
      %c0_76 = arith.constant 0 : index
      %c20 = arith.constant 20 : index
      %72 = vector.load %arg6[%c0_76, %c20] : memref<8x512xbf16, #tpu.memory_space<vmem>>, vector<8x384xbf16>
      %c40 = arith.constant 40 : index
      %c0_77 = arith.constant 0 : index
      %73 = vector.load %arg7[%c40, %c0_77] : memref<72x384xbf16, #tpu.memory_space<vmem>>, vector<8x384xbf16>
      tpu.vector_store %arg7[%c40, %c0_77], %72 {strides = array<i32>} : memref<72x384xbf16, #tpu.memory_space<vmem>>, vector<8x384xbf16>,
      %c0_78 = arith.constant 0 : index
      %c36 = arith.constant 36 : index
      %74 = vector.load %arg6[%c0_78, %c36] : memref<8x512xbf16, #tpu.memory_space<vmem>>, vector<8x384xbf16>
      %c48_79 = arith.constant 48 : index
      %c0_80 = arith.constant 0 : index
      %75 = vector.load %arg7[%c48_79, %c0_80] : memref<72x384xbf16, #tpu.memory_space<vmem>>, vector<8x384xbf16>
      tpu.vector_store %arg7[%c48_79, %c0_80], %74 {strides = array<i32>} : memref<72x384xbf16, #tpu.memory_space<vmem>>, vector<8x384xbf16>,
      %c0_81 = arith.constant 0 : index
      %c37_82 = arith.constant 37 : index
      %76 = vector.load %arg6[%c0_81, %c37_82] : memref<8x512xbf16, #tpu.memory_space<vmem>>, vector<8x384xbf16>
      %c56 = arith.constant 56 : index
      %c0_83 = arith.constant 0 : index
      %77 = vector.load %arg7[%c56, %c0_83] : memref<72x384xbf16, #tpu.memory_space<vmem>>, vector<8x384xbf16>
      tpu.vector_store %arg7[%c56, %c0_83], %76 {strides = array<i32>} : memref<72x384xbf16, #tpu.memory_space<vmem>>, vector<8x384xbf16>,
      %c0_84 = arith.constant 0 : index
      %c38 = arith.constant 38 : index
      %78 = vector.load %arg6[%c0_84, %c38] : memref<8x512xbf16, #tpu.memory_space<vmem>>, vector<8x384xbf16>
      %c64_85 = arith.constant 64 : index
      %c0_86 = arith.constant 0 : index
      %79 = vector.load %arg7[%c64_85, %c0_86] : memref<72x384xbf16, #tpu.memory_space<vmem>>, vector<8x384xbf16>
      tpu.vector_store %arg7[%c64_85, %c0_86], %78 {strides = array<i32>} : memref<72x384xbf16, #tpu.memory_space<vmem>>, vector<8x384xbf16>,
    } else {
    }
    %c0 = arith.constant 0 : index
    %c0_1 = arith.constant 0 : index
    %3 = vector.load %arg3[%c0, %c0_1] : memref<8x72xbf16, #tpu.memory_space<vmem>>, vector<8x72xbf16>
    %c0_2 = arith.constant 0 : index
    %c0_3 = arith.constant 0 : index
    %4 = vector.load %arg7[%c0_2, %c0_3] : memref<72x384xbf16, #tpu.memory_space<vmem>>, vector<72x384xbf16>
    %cst = arith.constant dense<0.000000e+00> : vector<8x384xf32>
    %5 = tpu.matmul %3, %4, %cst {dimension_numbers = #tpu.dot_dimension_numbers<[1], [0], [0], [1], [0, 0, 1, 1], [], []>} : vector<8x72xbf16>, vector<72x384xbf16>, vector<8x384xf32> -> vector<8x384xf32>
    %c0_4 = arith.constant 0 : index
    %c0_5 = arith.constant 0 : index
    %6 = vector.load %arg4[%c0_4, %c0_5] : memref<8x1xf32, #tpu.memory_space<vmem>>, vector<8x1xf32>
    %7 = vector.broadcast %6 : vector<8x1xf32> to vector<8x384xf32>
    %8 = arith.addf %5, %7 : vector<8x384xf32>
    %c0_6 = arith.constant 0 : index
    %c0_7 = arith.constant 0 : index
    %c0_8 = arith.constant 0 : index
    %9 = vector.load %arg5[%c0_6, %c0_7, %c0_8] : memref<1x8x384xf32, #tpu.memory_space<vmem>>, vector<1x8x384xf32>
    %10 = vector.shape_cast %9 : vector<1x8x384xf32> to vector<8x384xf32>
    %11 = vector.shape_cast %8 : vector<8x384xf32> to vector<1x8x384xf32>
    tpu.vector_store %arg5[%c0_6, %c0_7, %c0_8], %11 {strides = array<i32>} : memref<1x8x384xf32, #tpu.memory_space<vmem>>, vector<1x8x384xf32>,
    return
  }
  func.func @transform_0(%arg0: i32, %arg1: i32) -> (i32, i32, i32) {
    %c0_i32 = arith.constant 0 : i32
    %c0_i32_0 = arith.constant 0 : i32
    %c0_i32_1 = arith.constant 0 : i32
    return %arg0, %c0_i32, %c0_i32_0 : i32, i32, i32
  }
  func.func @transform_1(%arg0: i32, %arg1: i32) -> (i32, i32) {
    %c0_i32 = arith.constant 0 : i32
    %c0_i32_0 = arith.constant 0 : i32
    return %arg1, %c0_i32 : i32, i32
  }
  func.func @transform_2(%arg0: i32, %arg1: i32) -> (i32, i32) {
    %c0_i32 = arith.constant 0 : i32
    %c0_i32_0 = arith.constant 0 : i32
    return %arg1, %c0_i32 : i32, i32
  }
  func.func @transform_3(%arg0: i32, %arg1: i32) -> (i32, i32, i32) {
    %c0_i32 = arith.constant 0 : i32
    %c0_i32_0 = arith.constant 0 : i32
    return %arg0, %arg1, %c0_i32 : i32, i32, i32
  }
}

</mosaic_0001>

<llo_original>
// kernel: tpu_custom_call.1
$region0: #{tpu_custom_call.1}
  #allocation0 [shape = 'u32[]', space=smem, size = 0x4, offset = 0x4, fixed_abs, tag = 'smem constant byte address 0x4 - core index']
  #allocation1 [shape = 'u32[144,128]{1,0:T(1,128)}', space=vmem, size = 0x12000, scoped, tag = 'internal scratch']
  #allocation2 [shape = 'bf16[8,512]{1,0:T(8,128)(2,1)}', space=vmem, size = 0x2000, scoped, tag = 'scratch operand']
  #allocation3 [shape = 'bf16[72,384]{1,0:T(8,128)(2,1)}', space=vmem, size = 0xd800, scoped, tag = 'scratch operand']
  %s0 = inlined_call_operand.hbm [shape: bf16[2,8,256], index: 0, kind: input, shape index: {}]
  %s1 = inlined_call_operand.vmem [shape: bf16[8,72], index: 1, kind: input, shape index: {}]
  %s2 = inlined_call_operand.vmem [shape: f32[8,1], index: 2, kind: input, shape index: {}]
  %s3 = inlined_call_operand.hbm [shape: f32[2,8,384], index: 3, kind: output, shape index: {}]
  %s4 = sld [smem:[#allocation0]]
  $region53: #{tpu_custom_call.1} parent=0
    _
  %s6 = ssub.s32 1, %s4
  %s7 = scalar_select 0, %s6, %s4
  $region1: #{tpu_custom_call.1} parent=0
    #allocation4 [shape = 'u8[8192]{0}', space=vmem, size = 0x2000, scoped, tag = 'input window, operand 0']
    #allocation5 [shape = 's32[2]{0}', space=sflag, size = 0x8, scoped, tag = 'scoped memory for tpu_custom_call.1']
    #allocation6 [shape = 's32[2]{0}', space=sflag, size = 0x8, scoped, tag = 'scoped memory for tpu_custom_call.1']
    #allocation7 [shape = 'u8[24576]{0}', space=vmem, size = 0x6000, scoped, tag = 'output window, operand 0']
    %8 = vsyncpa [#allocation5], 0
    %s9 = scalar_lea.sflag [#allocation5], 1
    %10 = vsyncpa %s9, 0
    %11 = vsyncpa [#allocation6], 0
    %s12 = scalar_lea.sflag [#allocation6], 1
    %13 = vsyncpa %s12, 0
    loop: start=0, step=1, limit=4
    $region2: #{tpu_custom_call.1} parent=1 // loop_pre_header
      _
    $region3: #{tpu_custom_call.1} parent=1 // loop_header
      %s15 = sphi 0, %s19
      %p16 = scmp.ge.s32.totalorder %s15, 4
      %s22 = sphi 0, %s34
      %s23 = sphi 0, %s30
      %s24 = sphi 0, %s22
      %s25 = sphi 0, %s23
      %s26 = sphi 0, %s24
      %s27 = sphi 0, %s25
      %s37 = sphi 0, %s39
      %s40 = sphi 0, %s37
      %s41 = sphi 0, %s40
      %s57 = sphi 0, %s41
      %s63 = sphi 0, %s65
      %s66 = sphi 0, %s63
      %s67 = sphi 0, %s66
      %s83 = sphi 0, %s67
      %s89 = sphi 0, %s91
      %s92 = sphi 0, %s89
      %s93 = sphi 0, %s92
      %s109 = sphi 0, %s93
      %s117 = sphi 0, %s119
      %s120 = sphi 0, %s117
      %s121 = sphi 0, %s120
      %s137 = sphi 0, %s121
    $region4: #{tpu_custom_call.1} parent=1 // loop_header_branch
      %18 = sbr.rel (%p16) target = $region8
    $region5: #{tpu_custom_call.1} parent=1 // loop_body
      %s20 = ssub.s32 %s15, 1
      %s21 = ssub.s32 %s15, 2
      %s28 = sadd.s32 1, %s23
      %p29 = scmp.ge.s32.totalorder %s28, 1
      %s30 = scalar_select %p29, 0, %s28
      %s31 = sadd.s32 1, %s22
      %s32 = scalar_select %p29, %s31, %s22
      %p33 = scmp.ge.s32.totalorder %s32, 2
      %s34 = scalar_select %p33, 0, %s32
      %s35 = ssub.s32 %s22, %s34
      %p36 = scmp.eq.s32.totalorder %s35, 0
      %s38 = sadd.s32 %s37, 1
      %s39 = scalar_select %p36, %s37, %s38
      %p42 = pneg %p36
      %p43 = scmp.eq.s32.totalorder %s15, 1
      %p44 = por %p42, %p43
      %p45 = scmp.ne.s32.totalorder %s37, %s40
      %p46 = scmp.eq.s32.totalorder %s15, 0
      %p47 = por %p45, %p46
      %p48 = scmp.ne.s32.totalorder %s37, %s40
      %p49 = scmp.eq.s32.totalorder %s20, 1
      %p50 = por %p48, %p49
      %p51 = scmp.ne.s32.totalorder %s40, %s41
      %p52 = scmp.eq.s32.totalorder %s20, 0
      %p53 = por %p51, %p52
      %p54 = scmp.ne.s32.totalorder %s40, %s41
      %p55 = scmp.eq.s32.totalorder %s21, 1
      %p56 = por %p54, %p55
      %p58 = scmp.ne.s32.totalorder %s41, %s57
      %p59 = scmp.eq.s32.totalorder %s21, 0
      %p60 = por %p58, %p59
      %s61 = ssub.s32 %s23, %s30
      %p62 = scmp.eq.s32.totalorder %s61, 0
      %s64 = sadd.s32 %s63, 1
      %s65 = scalar_select %p62, %s63, %s64
      %p68 = pneg %p62
      %p69 = scmp.eq.s32.totalorder %s15, 1
      %p70 = por %p68, %p69
      %p71 = scmp.ne.s32.totalorder %s63, %s66
      %p72 = scmp.eq.s32.totalorder %s15, 0
      %p73 = por %p71, %p72
      %p74 = scmp.ne.s32.totalorder %s63, %s66
      %p75 = scmp.eq.s32.totalorder %s20, 1
      %p76 = por %p74, %p75
      %p77 = scmp.ne.s32.totalorder %s66, %s67
      %p78 = scmp.eq.s32.totalorder %s20, 0
      %p79 = por %p77, %p78
      %p80 = scmp.ne.s32.totalorder %s66, %s67
      %p81 = scmp.eq.s32.totalorder %s21, 1
      %p82 = por %p80, %p81
      %p84 = scmp.ne.s32.totalorder %s67, %s83
      %p85 = scmp.eq.s32.totalorder %s21, 0
      %p86 = por %p84, %p85
      %s87 = ssub.s32 %s23, %s30
      %p88 = scmp.eq.s32.totalorder %s87, 0
      %s90 = sadd.s32 %s89, 1
      %s91 = scalar_select %p88, %s89, %s90
      %p94 = pneg %p88
      %p95 = scmp.eq.s32.totalorder %s15, 1
      %p96 = por %p94, %p95
      %p97 = scmp.ne.s32.totalorder %s89, %s92
      %p98 = scmp.eq.s32.totalorder %s15, 0
      %p99 = por %p97, %p98
      %p100 = scmp.ne.s32.totalorder %s89, %s92
      %p101 = scmp.eq.s32.totalorder %s20, 1
      %p102 = por %p100, %p101
      %p103 = scmp.ne.s32.totalorder %s92, %s93
      %p104 = scmp.eq.s32.totalorder %s20, 0
      %p105 = por %p103, %p104
      %p106 = scmp.ne.s32.totalorder %s92, %s93
      %p107 = scmp.eq.s32.totalorder %s21, 1
      %p108 = por %p106, %p107
      %p110 = scmp.ne.s32.totalorder %s93, %s109
      %p111 = scmp.eq.s32.totalorder %s21, 0
      %p112 = por %p110, %p111
      %s113 = ssub.s32 %s22, %s34
      %s114 = ssub.s32 %s23, %s30
      %s115 = sor.u32 %s113, %s114
      %p116 = scmp.eq.s32.totalorder %s115, 0
      %s118 = sadd.s32 %s117, 1
      %s119 = scalar_select %p116, %s117, %s118
      %p122 = pneg %p116
      %p123 = scmp.eq.s32.totalorder %s15, 1
      %p124 = por %p122, %p123
      %p125 = scmp.ne.s32.totalorder %s117, %s120
      %p126 = scmp.eq.s32.totalorder %s15, 0
      %p127 = por %p125, %p126
      %p128 = scmp.ne.s32.totalorder %s117, %s120
      %p129 = scmp.eq.s32.totalorder %s20, 1
      %p130 = por %p128, %p129
      %p131 = scmp.ne.s32.totalorder %s120, %s121
      %p132 = scmp.eq.s32.totalorder %s20, 0
      %p133 = por %p131, %p132
      %p134 = scmp.ne.s32.totalorder %s120, %s121
      %p135 = scmp.eq.s32.totalorder %s21, 1
      %p136 = por %p134, %p135
      %p138 = scmp.ne.s32.totalorder %s121, %s137
      %p139 = scmp.eq.s32.totalorder %s21, 0
      %p140 = por %p138, %p139
      %p141 = scmp.le.s32.totalorder 1, %s15
      %p142 = scmp.lt.s32.totalorder %s15, 3
      %p143 = pnand %p141, %p142
      %p144 = pneg %p143
      // Predicated region
      $region9: #{tpu_custom_call.1} parent=5 // pred_check
        _
      $region10: #{tpu_custom_call.1} parent=5 // pred_check_branch
        %146 = sbr.rel (%p143) target = $region12
      $region11: #{tpu_custom_call.1} parent=5 // pred_region
        %s147 = ssub.s32 %s15, 1
        // Predicated region
        $region13: #{tpu_custom_call.1} parent=11 // pred_check
          %p148 = pneg %p79
        $region14: #{tpu_custom_call.1} parent=11 // pred_check_branch
          %150 = sbr.rel (%p148) target = $region16
        $region15: #{tpu_custom_call.1} parent=11 // pred_region
          %p151 = scmp.lt.s32.totalorder %s25, 0
          %s152 = scalar_select %p151, %s25, 0
          %s153 = smul.addr %s152, 4
          %s154 = scalar_lea.vmem %s1, %s153
        $region16: #{tpu_custom_call.1} parent=11 // pred_fallthru
          _
        // Predicated region
        $region17: #{tpu_custom_call.1} parent=11 // pred_check
          %p155 = pneg %p105
        $region18: #{tpu_custom_call.1} parent=11 // pred_check_branch
          %157 = sbr.rel (%p155) target = $region20
        $region19: #{tpu_custom_call.1} parent=11 // pred_region
          %p158 = scmp.lt.s32.totalorder %s25, 0
          %s159 = scalar_select %p158, %s25, 0
          %s160 = smul.addr %s159, 8
          %s161 = scalar_lea.vmem %s2, %s160
        $region20: #{tpu_custom_call.1} parent=11 // pred_fallthru
          _
      $region12: #{tpu_custom_call.1} parent=5 // pred_fallthru
        _
      %p162 = scmp.lt.s32.totalorder %s15, 2
      // Predicated region
      $region21: #{tpu_custom_call.1} parent=5 // pred_check
        %p163 = pneg %p162
      $region22: #{tpu_custom_call.1} parent=5 // pred_check_branch
        %165 = sbr.rel (%p163) target = $region24
      $region23: #{tpu_custom_call.1} parent=5 // pred_region
        // Predicated region
        $region25: #{tpu_custom_call.1} parent=23 // pred_check
          %p166 = pneg %p47
        $region26: #{tpu_custom_call.1} parent=23 // pred_check_branch
          %168 = sbr.rel (%p166) target = $region28
        $region27: #{tpu_custom_call.1} parent=23 // pred_region
          %s169 = sand.u32 %s37, 1
          %s170 = scalar_lea.sflag [#allocation5], %s169
          %s171 = sand.u32 %s37, 1
          %s172 = smul.addr %s171, 8
          %s173 = scalar_lea.vmem [#allocation4], %s172
          %s175 = ssub.s32 128, 128
          %176 = vsyncadd %s170, %s175
          %s177 = smul.addr %s22, 2
          %s178 = smul.addr %s177, 64
          %s179 = scalar_lea.hbm %s0, %s178
          %s181 = sshll.u32 %s173, 4
          %s182 = int_to_ptr.vmem [resolvable:$true] %s181
          %184 = dma.hbm_to_vmem [thread:$0]  %s179, 128, %s182, %s170
        $region28: #{tpu_custom_call.1} parent=23 // pred_fallthru
          _
      $region24: #{tpu_custom_call.1} parent=5 // pred_fallthru
        _
      %p185 = scmp.le.s32.totalorder 1, %s15
      %p186 = scmp.lt.s32.totalorder %s15, 3
      %p187 = pnand %p185, %p186
      %p188 = pneg %p187
      // Predicated region
      $region29: #{tpu_custom_call.1} parent=5 // pred_check
        _
      $region30: #{tpu_custom_call.1} parent=5 // pred_check_branch
        %190 = sbr.rel (%p187) target = $region32
      $region31: #{tpu_custom_call.1} parent=5 // pred_region
        %s191 = ssub.s32 %s15, 1
        %s192 = sand.u32 %s40, 1
        %s193 = scalar_lea.sflag [#allocation5], %s192
        %s194 = sand.u32 %s40, 1
        %s195 = smul.addr %s194, 8
        %s196 = scalar_lea.vmem [#allocation4], %s195
        // Predicated region
        $region33: #{tpu_custom_call.1} parent=31 // pred_check
          %p197 = pneg %p53
        $region34: #{tpu_custom_call.1} parent=31 // pred_check_branch
          %199 = sbr.rel (%p197) target = $region36
        $region35: #{tpu_custom_call.1} parent=31 // pred_region
          %200 = dma.done %s193, 128
        $region36: #{tpu_custom_call.1} parent=31 // pred_fallthru
          _
        %s201 = sand.u32 %s40, 1
        %s202 = scalar_lea.sflag [#allocation5], %s201
        %s203 = sand.u32 %s40, 1
        %s204 = smul.addr %s203, 8
        %s205 = scalar_lea.vmem [#allocation4], %s204
        %p206 = pneg %p53
        %p207 = pneg %p50
        %p208 = scmp.lt.s32.totalorder %s25, 0
        %s209 = scalar_select %p208, %s25, 0
        %s210 = smul.addr %s209, 4
        %s211 = scalar_lea.vmem %s1, %s210
        %p212 = pneg %p79
        %p213 = pneg %p76
        %p214 = scmp.lt.s32.totalorder %s25, 0
        %s215 = scalar_select %p214, %s25, 0
        %s216 = smul.addr %s215, 8
        %s217 = scalar_lea.vmem %s2, %s216
        %p218 = pneg %p105
        %p219 = pneg %p102
        %p220 = pneg %p133
        %p221 = pneg %p130
        %s222 = sand.u32 %s120, 1
        %s223 = scalar_lea.sflag [#allocation6], %s222
        %s224 = sand.u32 %s120, 1
        %s225 = smul.addr %s224, 24
        %s226 = scalar_lea.vmem [#allocation7], %s225
        %p227 = scmp.lt.s32.totalorder %s25, 0
        %s228 = scalar_select %p227, %s25, 0
        %s229 = smul.addr %s228, 4
        %s230 = scalar_lea.vmem %s1, %s229
        %p231 = scmp.lt.s32.totalorder %s25, 0
        %s232 = scalar_select %p231, %s25, 0
        %s233 = smul.addr %s232, 8
        %s234 = scalar_lea.vmem %s2, %s233
        %p236 = scmp.eq.s32.totalorder %s25, 0
        // Predicated region
        $region37: #{tpu_custom_call.1} parent=31 // pred_check
          %p237 = pneg %p236
        $region38: #{tpu_custom_call.1} parent=31 // pred_check_branch
          %239 = sbr.rel (%p237) target = $region40
        $region39: #{tpu_custom_call.1} parent=31 // pred_region
          %240 = vst [vmem:[#allocation2] sm:$0xff] 0
          %241 = vst [vmem:[#allocation2 + $0x8] sm:$0xff] 0
          %v242 = vld [vmem:[%s196] sm:$0xf]
          %244 = vrot.lane.b32.xlu0 %v242, 19
          %v245 = vpop.permute.xlu0 %244
          %vm247 = vcmask 281752
          %248 = vst.msk [vmem:[#allocation2] sm:$0xf] %vm247, %v245
          %v249 = vld [vmem:[%s196] sm:$0xf]
          %251 = vrot.lane.b32.xlu0 %v249, 21
          %v252 = vpop.permute.xlu0 %251
          %vm254 = vcmask 429352
          %255 = vst.msk [vmem:[#allocation2] sm:$0xf] %vm254, %v252
          %v256 = vld [vmem:[%s196] sm:$0xf]
          %258 = vrot.lane.b32.xlu0 %v256, 23
          %v259 = vpop.permute.xlu0 %258
          %vm261 = vcmask 576952
          %262 = vst.msk [vmem:[#allocation2] sm:$0xf] %vm261, %v259
          %v263 = vld [vmem:[%s196] sm:$0xf]
          %265 = vrot.lane.b32.xlu0 %v263, 25
          %v266 = vpop.permute.xlu0 %265
          %vm268 = vcmask 724552
          %269 = vst.msk [vmem:[#allocation2] sm:$0xf] %vm268, %v266
          %v270 = vld [vmem:[%s196] sm:$0xf]
          %272 = vrot.lane.b32.xlu0 %v270, 27
          %v273 = vpop.permute.xlu0 %272
          %vm275 = vcmask 872152
          %276 = vst.msk [vmem:[#allocation2] sm:$0xf] %vm275, %v273
          %v277 = vld [vmem:[%s196] sm:$0xf]
          %279 = vrot.lane.b32.xlu0 %v277, 29
          %v280 = vpop.permute.xlu0 %279
          %vm282 = vcmask 1019752
          %283 = vst.msk [vmem:[#allocation2] sm:$0xf] %vm282, %v280
          %v284 = vld [vmem:[%s196] sm:$0xf]
          %286 = vrot.lane.b32.xlu0 %v284, 31
          %v287 = vpop.permute.xlu0 %286
          %v288 = vrot.slane %v287, 4
          %vm289 = vcmask 252928
          %v290 = vsel %vm289, %v288, %v287
          %vm292 = vcmask 1044472
          %vm293 = vcmask 121860
          %vm294 = vmor %vm293, %vm292
          %295 = vst.msk [vmem:[#allocation2] sm:$0xff] %vm294, %v290
          %v296 = vld [vmem:[%s196] sm:$0xf]
          %298 = vrot.lane.b32.xlu0 %v296, 33
          %v299 = vpop.permute.xlu0 %298
          %vm301 = vcmask 265352
          %302 = vst.msk [vmem:[#allocation2 + $0x4] sm:$0xf] %vm301, %v299
          %v303 = vld [vmem:[%s196 + $0x4] sm:$0xf]
          %305 = vrot.lane.b32.xlu0 %v303, 35
          %v306 = vpop.permute.xlu0 %305
          %vm308 = vcmask 412952
          %309 = vst.msk [vmem:[#allocation2 + $0x4] sm:$0xf] %vm308, %v306
          %v310 = vld [vmem:[%s196 + $0x4] sm:$0xf]
          %312 = vrot.lane.b32.xlu0 %v310, 37
          %v313 = vpop.permute.xlu0 %312
          %vm315 = vcmask 560552
          %316 = vst.msk [vmem:[#allocation2 + $0x4] sm:$0xf] %vm315, %v313
          %v317 = vld [vmem:[%s196 + $0x4] sm:$0xf]
          %319 = vrot.lane.b32.xlu0 %v317, 39
          %v320 = vpop.permute.xlu0 %319
          %vm322 = vcmask 708152
          %323 = vst.msk [vmem:[#allocation2 + $0x4] sm:$0xf] %vm322, %v320
          %v324 = vld [vmem:[%s196 + $0x4] sm:$0xf]
          %326 = vrot.lane.b32.xlu0 %v324, 41
          %v327 = vpop.permute.xlu0 %326
          %vm329 = vcmask 855752
          %330 = vst.msk [vmem:[#allocation2 + $0x4] sm:$0xf] %vm329, %v327
          %v331 = vld [vmem:[%s196 + $0x4] sm:$0xf]
          %333 = vrot.lane.b32.xlu0 %v331, 43
          %v334 = vpop.permute.xlu0 %333
          %vm336 = vcmask 1003352
          %337 = vst.msk [vmem:[#allocation2 + $0x4] sm:$0xf] %vm336, %v334
          %v338 = vld [vmem:[%s196 + $0x4] sm:$0xf]
          %340 = vrot.lane.b32.xlu0 %v338, 45
          %v341 = vpop.permute.xlu0 %340
          %v342 = vrot.slane %v341, 4
          %vm343 = vcmask 367616
          %v344 = vsel %vm343, %v342, %v341
          %vm346 = vcmask 1044456
          %vm347 = vcmask 105476
          %vm348 = vmor %vm347, %vm346
          %349 = vst.msk [vmem:[#allocation2 + $0x4] sm:$0xff] %vm348, %v344
          %v350 = vld [vmem:[%s196 + $0x4] sm:$0xf]
          %352 = vrot.lane.b32.xlu0 %v350, 47
          %v353 = vpop.permute.xlu0 %352
          %vm355 = vcmask 248952
          %356 = vst.msk [vmem:[#allocation2 + $0x8] sm:$0xf] %vm355, %v353
          %v357 = vld [vmem:[%s196 + $0x4] sm:$0xf]
          %359 = vrot.lane.b32.xlu0 %v357, 49
          %v360 = vpop.permute.xlu0 %359
          %vm362 = vcmask 396552
          %363 = vst.msk [vmem:[#allocation2 + $0x8] sm:$0xf] %vm362, %v360
          %v364 = vld [vmem:[#allocation2] sm:$0xff]
          %v365 = vld [vmem:[#allocation2 + $0x8] sm:$0xf]
          %366 = vst [vmem:[#allocation3] sm:$0xff] %v364
          %367 = vst [vmem:[#allocation3 + $0x8] sm:$0xf] %v365
          %v368 = vld [vmem:[#allocation2] sm:$0xff]
          %v369 = vld [vmem:[#allocation2 + $0x8] sm:$0xff]
          %372 = vrot.lane.b32.xlu0 %v368, 127
          %v373 = vpop.permute.xlu0 %372
          %374 = vrot.lane.b32.xlu0 %v369, 127
          %v375 = vpop.permute.xlu0 %374
          %v376 = vrot.slane %v373, 4
          %v377 = vrot.slane %v375, 4
          %vm378 = vcmask 1043456
          %v379 = vsel %vm378, %v376, %v377
          %vm380 = vcmask 1039360
          %v381 = vsel %vm380, %v373, %v379
          %v382 = vsel %vm380, %v375, %v377
          %385 = vst [vmem:[#allocation3 + $0xc] sm:$0xff] %v381
          %386 = vst [vmem:[#allocation3 + $0x14] sm:$0xf] %v382
          %v387 = vld [vmem:[#allocation2] sm:$0xff]
          %v388 = vld [vmem:[#allocation2 + $0x8] sm:$0xff]
          %391 = vrot.lane.b32.xlu0 %v387, 126
          %v392 = vpop.permute.xlu0 %391
          %393 = vrot.lane.b32.xlu0 %v388, 126
          %v394 = vpop.permute.xlu0 %393
          %v395 = vrot.slane %v392, 4
          %v396 = vrot.slane %v394, 4
          %v397 = vsel %vm378, %v395, %v396
          %vm398 = vcmask 1031168
          %v399 = vsel %vm398, %v392, %v397
          %v400 = vsel %vm398, %v394, %v396
          %403 = vst [vmem:[#allocation3 + $0x18] sm:$0xff] %v399
          %404 = vst [vmem:[#allocation3 + $0x20] sm:$0xf] %v400
          %v405 = vld [vmem:[#allocation2] sm:$0xff]
          %v406 = vld [vmem:[#allocation2 + $0x8] sm:$0xff]
          %409 = vrot.lane.b32.xlu0 %v405, 110
          %v410 = vpop.permute.xlu0 %409
          %411 = vrot.lane.b32.xlu0 %v406, 110
          %v412 = vpop.permute.xlu0 %411
          %v413 = vrot.slane %v410, 4
          %v414 = vrot.slane %v412, 4
          %v415 = vsel %vm378, %v413, %v414
          %vm416 = vcmask 900096
          %v417 = vsel %vm416, %v410, %v415
          %v418 = vsel %vm416, %v412, %v414
          %421 = vst [vmem:[#allocation3 + $0x24] sm:$0xff] %v417
          %422 = vst [vmem:[#allocation3 + $0x2c] sm:$0xf] %v418
          %v423 = vld [vmem:[#allocation2] sm:$0xff]
          %v424 = vld [vmem:[#allocation2 + $0x8] sm:$0xff]
          %427 = vrot.lane.b32.xlu0 %v423, 109
          %v428 = vpop.permute.xlu0 %427
          %429 = vrot.lane.b32.xlu0 %v424, 109
          %v430 = vpop.permute.xlu0 %429
          %v431 = vrot.slane %v428, 4
          %v432 = vrot.slane %v430, 4
          %v433 = vsel %vm378, %v431, %v432
          %vm434 = vcmask 891904
          %v435 = vsel %vm434, %v428, %v433
          %v436 = vsel %vm434, %v430, %v432
          %439 = vst [vmem:[#allocation3 + $0x30] sm:$0xff] %v435
          %440 = vst [vmem:[#allocation3 + $0x38] sm:$0xf] %v436
          %v441 = vld [vmem:[#allocation2] sm:$0xff]
          %v442 = vld [vmem:[#allocation2 + $0x8] sm:$0xff]
          %445 = vrot.lane.b32.xlu0 %v441, 108
          %v446 = vpop.permute.xlu0 %445
          %447 = vrot.lane.b32.xlu0 %v442, 108
          %v448 = vpop.permute.xlu0 %447
          %v449 = vrot.slane %v446, 4
          %v450 = vrot.slane %v448, 4
          %v451 = vsel %vm378, %v449, %v450
          %vm452 = vcmask 883712
          %v453 = vsel %vm452, %v446, %v451
          %v454 = vsel %vm452, %v448, %v450
          %457 = vst [vmem:[#allocation3 + $0x3c] sm:$0xff] %v453
          %458 = vst [vmem:[#allocation3 + $0x44] sm:$0xf] %v454
          %v459 = vld [vmem:[#allocation2] sm:$0xff]
          %v460 = vld [vmem:[#allocation2 + $0x8] sm:$0xff]
          %463 = vrot.lane.b32.xlu0 %v459, 92
          %v464 = vpop.permute.xlu0 %463
          %465 = vrot.lane.b32.xlu0 %v460, 92
          %v466 = vpop.permute.xlu0 %465
          %v467 = vrot.slane %v464, 4
          %v468 = vrot.slane %v466, 4
          %v469 = vsel %vm378, %v467, %v468
          %vm470 = vcmask 752640
          %v471 = vsel %vm470, %v464, %v469
          %v472 = vsel %vm470, %v466, %v468
          %475 = vst [vmem:[#allocation3 + $0x48] sm:$0xff] %v471
          %476 = vst [vmem:[#allocation3 + $0x50] sm:$0xf] %v472
          %v477 = vld [vmem:[#allocation2] sm:$0xff]
          %v478 = vld [vmem:[#allocation2 + $0x8] sm:$0xff]
          %481 = vrot.lane.b32.xlu0 %v477, 91
          %v482 = vpop.permute.xlu0 %481
          %483 = vrot.lane.b32.xlu0 %v478, 91
          %v484 = vpop.permute.xlu0 %483
          %v485 = vrot.slane %v482, 4
          %v486 = vrot.slane %v484, 4
          %v487 = vsel %vm378, %v485, %v486
          %vm488 = vcmask 744448
          %v489 = vsel %vm488, %v482, %v487
          %v490 = vsel %vm488, %v484, %v486
          %493 = vst [vmem:[#allocation3 + $0x54] sm:$0xff] %v489
          %494 = vst [vmem:[#allocation3 + $0x5c] sm:$0xf] %v490
          %v495 = vld [vmem:[#allocation2] sm:$0xff]
          %v496 = vld [vmem:[#allocation2 + $0x8] sm:$0xff]
          %499 = vrot.lane.b32.xlu0 %v495, 90
          %v500 = vpop.permute.xlu0 %499
          %501 = vrot.lane.b32.xlu0 %v496, 90
          %v502 = vpop.permute.xlu0 %501
          %v503 = vrot.slane %v500, 4
          %v504 = vrot.slane %v502, 4
          %v505 = vsel %vm378, %v503, %v504
          %vm506 = vcmask 736256
          %v507 = vsel %vm506, %v500, %v505
          %v508 = vsel %vm506, %v502, %v504
          %511 = vst [vmem:[#allocation3 + $0x60] sm:$0xff] %v507
          %512 = vst [vmem:[#allocation3 + $0x68] sm:$0xf] %v508
        $region40: #{tpu_custom_call.1} parent=31 // pred_fallthru
          _
        %v513 = vld [vmem:[%s230] sm:$0xf]
        %v514 = vld [vmem:[#allocation3] sm:$0xff]
        %v515 = vld [vmem:[#allocation3 + $0x8] sm:$0xf]
        %v516 = vld [vmem:[#allocation3 + $0xc] sm:$0xff]
        %v517 = vld [vmem:[#allocation3 + $0x14] sm:$0xf]
        %v518 = vld [vmem:[#allocation3 + $0x18] sm:$0xff]
        %v519 = vld [vmem:[#allocation3 + $0x20] sm:$0xf]
        %v520 = vld [vmem:[#allocation3 + $0x24] sm:$0xff]
        %v521 = vld [vmem:[#allocation3 + $0x2c] sm:$0xf]
        %v522 = vld [vmem:[#allocation3 + $0x30] sm:$0xff]
        %v523 = vld [vmem:[#allocation3 + $0x38] sm:$0xf]
        %v524 = vld [vmem:[#allocation3 + $0x3c] sm:$0xff]
        %v525 = vld [vmem:[#allocation3 + $0x44] sm:$0xf]
        %v526 = vld [vmem:[#allocation3 + $0x48] sm:$0xff]
        %v527 = vld [vmem:[#allocation3 + $0x50] sm:$0xf]
        %v528 = vld [vmem:[#allocation3 + $0x54] sm:$0xff]
        %v529 = vld [vmem:[#allocation3 + $0x5c] sm:$0xf]
        %v530 = vld [vmem:[#allocation3 + $0x60] sm:$0xff]
        %v531 = vld [vmem:[#allocation3 + $0x68] sm:$0xf]
        %v532 = vld [vmem:[%s234] sm:$0xff]
        %534 = vset.pattern.permute.xlu0 0
        %535 = vperm.xlu0 %534, %v532
        %v536 = vpop.permute.xlu0 %535
        %v556 = vunpack.c.l.b16 %v514
        %v557 = vunpack.c.h.b16 %v514
        %v558 = vunpack.c.l.b16 %v515
        %v559 = vunpack.c.l.b16 %v516
        %v560 = vunpack.c.h.b16 %v516
        %v561 = vunpack.c.l.b16 %v517
        %v562 = vunpack.c.l.b16 %v518
        %v563 = vunpack.c.h.b16 %v518
        %v564 = vunpack.c.l.b16 %v519
        %v565 = vunpack.c.l.b16 %v520
        %v566 = vunpack.c.h.b16 %v520
        %v567 = vunpack.c.l.b16 %v521
        %v568 = vunpack.c.l.b16 %v522
        %v569 = vunpack.c.h.b16 %v522
        %v570 = vunpack.c.l.b16 %v523
        %v571 = vunpack.c.l.b16 %v524
        %v572 = vunpack.c.h.b16 %v524
        %v573 = vunpack.c.l.b16 %v525
        %v574 = vunpack.c.l.b16 %v526
        %v575 = vunpack.c.h.b16 %v526
        %v576 = vunpack.c.l.b16 %v527
        %v577 = vunpack.c.l.b16 %v528
        %v578 = vunpack.c.h.b16 %v528
        %v579 = vunpack.c.l.b16 %v529
        %v580 = vunpack.c.l.b16 %v530
        %v581 = vunpack.c.h.b16 %v530
        %v582 = vunpack.c.l.b16 %v531
        %v583 = vpack.c.b16 %v559, %v556
        %v584 = vpack.c.b16 %v560, %v557
        %v585 = vpack.c.b16 %v561, %v558
        %v586 = vpack.c.b16 %v565, %v562
        %v587 = vpack.c.b16 %v566, %v563
        %v588 = vpack.c.b16 %v567, %v564
        %v589 = vpack.c.b16 %v571, %v568
        %v590 = vpack.c.b16 %v572, %v569
        %v591 = vpack.c.b16 %v573, %v570
        %v592 = vpack.c.b16 %v577, %v574
        %v593 = vpack.c.b16 %v578, %v575
        %v594 = vpack.c.b16 %v579, %v576
        %v595 = vpack.c.b16 %v580, %v580
        %v596 = vpack.c.b16 %v581, %v581
        %v597 = vpack.c.b16 %v582, %v582
        %vm610 = vcmask 588800
        %v612 = vsel %vm610, %v513, 0
        %vm614 = vcmask 1043456
        %v616 = vsel %vm614, %v595, 0
        %v619 = vsel %vm614, %v596, 0
        %v622 = vsel %vm614, %v597, 0
        %624 = vmatprep.subr.bf16.mxu0 %v584
        %625 = vmatpush1.bf16.msra.mxu0 %v583
        %626 = vmatprep.subr.bf16.mxu0 %v587
        %627 = vmatpush1.bf16.msra.mxu0 %v586
        %628 = vmatprep.subr.bf16.mxu0 %v590
        %629 = vmatpush1.bf16.msra.mxu0 %v589
        %630 = vmatprep.subr.bf16.mxu0 %v593
        %631 = vmatpush1.bf16.msra.mxu0 %v592
        %632 = vmatprep.subr.bf16.mxu0 %v619
        %633 = vmatpush1.bf16.msra.mxu0 %v616
        %634 = vmatprep.subr.bf16.mxu0 0
        %635 = vmatpush1.bf16.msra.mxu0 0
        %636 = vmatprep.subr.bf16.mxu0 0
        %637 = vmatpush1.bf16.msra.mxu0 0
        %638 = vmatprep.subr.bf16.mxu0 0
        %639 = vmatpush1.bf16.msra.mxu0 0
        %640 = vmatprep.subr.bf16.mxu0 0
        %641 = vmatpush1.bf16.msra.mxu0 0
        %642 = vmatprep.subr.bf16.mxu0 0
        %643 = vmatpush1.bf16.msra.mxu0 0
        %644 = vmatprep.subr.bf16.mxu0 0
        %645 = vmatpush1.bf16.msra.mxu0 0
        %646 = vmatprep.subr.bf16.mxu0 0
        %647 = vmatpush1.bf16.msra.mxu0 0
        %648 = vmatprep.subr.bf16.mxu0 0
        %649 = vmatpush1.bf16.msra.mxu0 0
        %650 = vmatprep.subr.bf16.mxu0 0
        %651 = vmatpush1.bf16.msra.mxu0 0
        %652 = vmatprep.subr.bf16.mxu0 0
        %653 = vmatpush1.bf16.msra.mxu0 0
        %654 = vmatprep.subr.bf16.mxu0 0
        %655 = vmatpush1.bf16.msra.mxu0 0
        %656 = vmatprep.mubr.bf16.mxu0 0
        %657 = vmatmul.mubr.bf16.gmra.mrb[0].mxu0 %v612
        %v658 = vpop.f32.mrb[0].mxu0
        %v659 = vadd.f32 %v536, %v658
        %v660 = vpop.f32.mrb[0].mxu0
        %v661 = vadd.f32 %v536, %v660
        %v662 = vpop.f32.mrb[0].mxu0
        %v663 = vpop.f32.mrb[0].mxu0
        %664 = vdwg.mxu0
        %665 = vmatprep.subr.bf16.mxu0 0
        %666 = vmatpush1.bf16.msra.mxu0 %v585
        %667 = vmatprep.subr.bf16.mxu0 0
        %668 = vmatpush1.bf16.msra.mxu0 %v588
        %669 = vmatprep.subr.bf16.mxu0 0
        %670 = vmatpush1.bf16.msra.mxu0 %v591
        %671 = vmatprep.subr.bf16.mxu0 0
        %672 = vmatpush1.bf16.msra.mxu0 %v594
        %673 = vmatprep.subr.bf16.mxu0 0
        %674 = vmatpush1.bf16.msra.mxu0 %v622
        %675 = vmatprep.subr.bf16.mxu0 0
        %676 = vmatpush1.bf16.msra.mxu0 0
        %677 = vmatprep.subr.bf16.mxu0 0
        %678 = vmatpush1.bf16.msra.mxu0 0
        %679 = vmatprep.subr.bf16.mxu0 0
        %680 = vmatpush1.bf16.msra.mxu0 0
        %681 = vmatprep.subr.bf16.mxu0 0
        %682 = vmatpush1.bf16.msra.mxu0 0
        %683 = vmatprep.subr.bf16.mxu0 0
        %684 = vmatpush1.bf16.msra.mxu0 0
        %685 = vmatprep.subr.bf16.mxu0 0
        %686 = vmatpush1.bf16.msra.mxu0 0
        %687 = vmatprep.subr.bf16.mxu0 0
        %688 = vmatpush1.bf16.msra.mxu0 0
        %689 = vmatprep.subr.bf16.mxu0 0
        %690 = vmatpush1.bf16.msra.mxu0 0
        %691 = vmatprep.subr.bf16.mxu0 0
        %692 = vmatpush1.bf16.msra.mxu0 0
        %693 = vmatprep.subr.bf16.mxu0 0
        %694 = vmatpush1.bf16.msra.mxu0 0
        %695 = vmatprep.subr.bf16.mxu0 0
        %696 = vmatpush1.bf16.msra.mxu0 0
        %697 = vmatprep.mubr.bf16.mxu0 0
        %698 = vmatmul.mubr.bf16.gmra.mrb[0].mxu0 %v612
        %v699 = vpop.f32.mrb[0].mxu0
        %v700 = vadd.f32 %v536, %v699
        %v701 = vpop.f32.mrb[0].mxu0
        %v702 = vpop.f32.mrb[0].mxu0
        %v703 = vpop.f32.mrb[0].mxu0
        %704 = vdwg.mxu0
        %705 = vst [vmem:[%s226] sm:$0xff] %v659
        %706 = vst [vmem:[%s226 + $0x8] sm:$0xff] %v661
        %707 = vst [vmem:[%s226 + $0x10] sm:$0xff] %v700
        %s708 = sand.u32 %s120, 1
        %s709 = scalar_lea.sflag [#allocation6], %s708
        %s710 = sand.u32 %s120, 1
        %s711 = smul.addr %s710, 24
        %s712 = scalar_lea.vmem [#allocation7], %s711
        // Predicated region
        $region41: #{tpu_custom_call.1} parent=31 // pred_check
          %p713 = pneg %p130
        $region42: #{tpu_custom_call.1} parent=31 // pred_check_branch
          %715 = sbr.rel (%p713) target = $region44
        $region43: #{tpu_custom_call.1} parent=31 // pred_region
          %s717 = ssub.s32 384, 384
          %718 = vsyncadd %s709, %s717
          %s719 = smul.addr %s25, 3
          %s720 = smul.addr %s24, 3
          %s721 = sadd.s32 %s719, %s720
          %s722 = smul.addr %s721, 128
          %s723 = scalar_lea.hbm %s3, %s722
          %s725 = sshll.u32 %s712, 4
          %s726 = int_to_ptr.vmem [resolvable:$true] %s725
          %728 = dma.vmem_to_hbm [thread:$0]  %s726, 384, %s723, %s709
        $region44: #{tpu_custom_call.1} parent=31 // pred_fallthru
          _
      $region32: #{tpu_custom_call.1} parent=5 // pred_fallthru
        _
      %p729 = scmp.le.s32.totalorder 2, %s15
      // Predicated region
      $region45: #{tpu_custom_call.1} parent=5 // pred_check
        %p730 = pneg %p729
      $region46: #{tpu_custom_call.1} parent=5 // pred_check_branch
        %732 = sbr.rel (%p730) target = $region48
      $region47: #{tpu_custom_call.1} parent=5 // pred_region
        %s733 = ssub.s32 %s15, 2
        // Predicated region
        $region49: #{tpu_custom_call.1} parent=47 // pred_check
          %p734 = pneg %p136
        $region50: #{tpu_custom_call.1} parent=47 // pred_check_branch
          %736 = sbr.rel (%p734) target = $region52
        $region51: #{tpu_custom_call.1} parent=47 // pred_region
          %s737 = sand.u32 %s121, 1
          %s738 = scalar_lea.sflag [#allocation6], %s737
          %s739 = sand.u32 %s121, 1
          %s740 = smul.addr %s739, 24
          %s741 = scalar_lea.vmem [#allocation7], %s740
          %742 = dma.done %s738, 384
        $region52: #{tpu_custom_call.1} parent=47 // pred_fallthru
          _
      $region48: #{tpu_custom_call.1} parent=5 // pred_fallthru
        _
    $region6: #{tpu_custom_call.1} parent=1 // loop_footer
      %s19 = sadd.s32 1, %s15
    $region7: #{tpu_custom_call.1} parent=1 // loop_footer_branch
      %14 = sbr.rel target = $region3
    $region8: #{tpu_custom_call.1} parent=1 // loop_exit
      _
    %743 = vsyncpa [#allocation5], 1
    %s744 = scalar_lea.sflag [#allocation5], 1
    %745 = vsyncpa %s744, 1
    %746 = vsyncpa [#allocation6], 1
    %s747 = scalar_lea.sflag [#allocation6], 1
    %748 = vsyncpa %s747, 1

</llo_original>
